<compile_context>
chip_gen: v6e
topology: v6e:2x2x1
jax: 0.10.0
libtpu: 0.0.40
codegen_flags: <defaults>
</compile_context>

<pallas_src>
import functools

import jax
import jax.numpy as jnp
from jax.experimental import pallas as pl
from jax.experimental.pallas import tpu as pltpu

# ---------------- config (small stand-ins for resnet50 / gpt2 dims) ----------
B = 2                  # batch
CIN, H, W = 4, 16, 16  # image channels / spatial
ENC_DIM = 32           # stand-in for encoder_dim = 2048
EMB = 32               # stand-in for decoder_embedding_dim = 768
HEADS, DH = 4, 8       # EMB = HEADS * DH
LAYERS = 2             # stand-in for 12 GPT2 blocks
MLP = 4 * EMB
VOCAB = 64             # stand-in for len(tokenizer)
SEQ = 8                # input_ids length; decoder sees T = SEQ + 1 (image prefix)
MAXPOS = 32
LN_EPS = 1e-5
NEG_INF = -1e9


# ---------------- small in-kernel helpers -------------------------------------
def _ln(x, g, b):
    mu = jnp.mean(x, axis=-1, keepdims=True)
    var = jnp.mean(jnp.square(x - mu), axis=-1, keepdims=True)
    return (x - mu) * jax.lax.rsqrt(var + LN_EPS) * g + b


def _gelu_new(y):  # GPT2 tanh-approx GELU
    return 0.5 * y * (1.0 + jnp.tanh(0.7978845608028654 * (y + 0.044715 * y * y * y)))


# ---------------- fused encoder kernel: conv(matmul) + ReLU + GAP + fc --------
def _encoder_kernel(p_ref, cw_ref, cb_ref, fw_ref, fb_ref, o_ref):
    # p_ref: (HW, 9*CIN) bf16 patches for one image; weights bf16, biases f32.
    x = jnp.dot(p_ref[...], cw_ref[...], preferred_element_type=jnp.float32)
    x = jnp.maximum(x + cb_ref[...], 0.0)             # (HW, ENC_DIM), conv + ReLU
    feat = jnp.mean(x, axis=0, keepdims=True)         # (1, ENC_DIM), global avg pool
    o_ref[...] = jnp.dot(feat.astype(jnp.bfloat16), fw_ref[...],
                         preferred_element_type=jnp.float32) + fb_ref[...]


def encode_images(params, images):
    Bi, Ci, Hi, Wi = images.shape
    # TODO(synk): im2col done in the wrapper; at real ResNet scale the patch
    # expansion should be generated on the fly inside the kernel (or via lax.conv)
    # to avoid the 9x HBM blow-up.
    x = jnp.transpose(images, (0, 2, 3, 1))                       # NCHW -> NHWC
    xp = jnp.pad(x, ((0, 0), (1, 1), (1, 1), (0, 0)))
    patches = jnp.concatenate(
        [xp[:, i:i + Hi, j:j + Wi, :] for i in range(3) for j in range(3)], axis=-1)
    patches = patches.reshape(Bi, Hi * Wi, 9 * Ci).astype(jnp.bfloat16)

    out = pl.pallas_call(
        _encoder_kernel,
        out_shape=jax.ShapeDtypeStruct((Bi, 1, EMB), jnp.float32),
        grid=(Bi,),
        in_specs=[pl.BlockSpec((None, Hi * Wi, 9 * Ci), lambda b: (b, 0, 0)),
                  pl.BlockSpec((9 * Ci, ENC_DIM), lambda b: (0, 0)),
                  pl.BlockSpec((1, ENC_DIM), lambda b: (0, 0)),
                  pl.BlockSpec((ENC_DIM, EMB), lambda b: (0, 0)),
                  pl.BlockSpec((1, EMB), lambda b: (0, 0))],
        out_specs=pl.BlockSpec((None, 1, EMB), lambda b: (b, 0, 0)),
        compiler_params=pltpu.CompilerParams(dimension_semantics=("parallel",)),
    )(patches, params["conv_w"], params["conv_b"], params["fc_w"], params["fc_b"])
    return out.reshape(Bi, EMB)


# ---------------- fused decoder-stack kernel ----------------------------------
def _decoder_kernel(h0_ref, mask_ref, ln1g_ref, ln1b_ref, qkvw_ref, qkvb_ref,
                    projw_ref, projb_ref, ln2g_ref, ln2b_ref,
                    fcw_ref, fcb_ref, pjw_ref, pjb_ref,
                    lnfg_ref, lnfb_ref, wte_ref,
                    logits_ref, h_ref, *, batch, tpad, heads, dh, emb):
    layer = pl.program_id(0)

    @pl.when(layer == 0)
    def _():
        h_ref[...] = h0_ref[...]

    h = h_ref[...]                                         # (batch*tpad, emb) f32

    # ---- self-attention sub-block ------------------------------------------
    x = _ln(h, ln1g_ref[...], ln1b_ref[...])
    qkv = jnp.dot(x.astype(jnp.bfloat16), qkvw_ref[...],
                  preferred_element_type=jnp.float32) + qkvb_ref[...]

    # causal + key-padding bias built in-kernel (no (B,T,T) HBM tensor)
    rows = jax.lax.broadcasted_iota(jnp.int32, (tpad, tpad), 0)
    cols = jax.lax.broadcasted_iota(jnp.int32, (tpad, tpad), 1)
    causal = cols <= rows
    mask = mask_ref[...]                                   # (batch, tpad) f32
    scale = 1.0 / (dh ** 0.5)

    per_batch = []
    for b in range(batch):                                 # unrolled, all in VMEM
        qkv_b = qkv[b * tpad:(b + 1) * tpad, :]            # (tpad, 3*emb)
        keep = jnp.logical_and(causal, mask[b:b + 1, :] > 0.5)
        bias = jnp.where(keep, 0.0, NEG_INF)
        heads_out = []
        for hh in range(heads):                            # unrolled over heads
            qh = qkv_b[:, hh * dh:(hh + 1) * dh]
            kh = qkv_b[:, emb + hh * dh:emb + (hh + 1) * dh]
            vh = qkv_b[:, 2 * emb + hh * dh:2 * emb + (hh + 1) * dh]
            s = jax.lax.dot_general(qh.astype(jnp.bfloat16), kh.astype(jnp.bfloat16),
                                    (((1,), (1,)), ((), ())),
                                    preferred_element_type=jnp.float32) * scale
            s = s + bias
            m = jnp.max(s, axis=-1, keepdims=True)
            p = jnp.exp(s - m)
            p = p * pl.reciprocal(jnp.sum(p, axis=-1, keepdims=True), approx=True)
            heads_out.append(jnp.dot(p.astype(jnp.bfloat16), vh.astype(jnp.bfloat16),
                                     preferred_element_type=jnp.float32))
        per_batch.append(jnp.concatenate(heads_out, axis=-1))   # (tpad, emb)
    attn = jnp.concatenate(per_batch, axis=0)                   # (batch*tpad, emb)

    attn = jnp.dot(attn.astype(jnp.bfloat16), projw_ref[...],
                   preferred_element_type=jnp.float32) + projb_ref[...]
    h = h + attn

    # ---- MLP sub-block -------------------------------------------------------
    x2 = _ln(h, ln2g_ref[...], ln2b_ref[...])
    hid = jnp.dot(x2.astype(jnp.bfloat16), fcw_ref[...],
                  preferred_element_type=jnp.float32) + fcb_ref[...]
    hid = _gelu_new(hid)
    h = h + jnp.dot(hid.astype(jnp.bfloat16), pjw_ref[...],
                    preferred_element_type=jnp.float32) + pjb_ref[...]
    h_ref[...] = h                                         # residual stream stays in VMEM

    # ---- final LN + tied LM head (contract EMB vs EMB: no wte transpose) ----
    @pl.when(layer == pl.num_programs(0) - 1)
    def _():
        hf = _ln(h, lnfg_ref[...], lnfb_ref[...])
        logits_ref[...] = jax.lax.dot_general(
            hf.astype(jnp.bfloat16), wte_ref[...],
            (((1,), (1,)), ((), ())), preferred_element_type=jnp.float32)
        # TODO(synk): at real GPT-2 vocab (50257) this LM-head / logits block must be
        # tiled over the vocab axis (and vmem_limit_bytes set) to fit v7x VMEM.


def run_decoder(params, h0, mask):
    rows, _ = h0.shape                   # rows = B * TPAD
    batch, tpad = mask.shape

    def _const(shape):
        return pl.BlockSpec(shape, lambda l: (0,) * len(shape))

    def _per_layer(shape):
        return pl.BlockSpec((None,) + shape, lambda l: (l,) + (0,) * len(shape))

    kernel = functools.partial(_decoder_kernel, batch=batch, tpad=tpad,
                               heads=HEADS, dh=DH, emb=EMB)
    return pl.pallas_call(
        kernel,
        out_shape=jax.ShapeDtypeStruct((rows, VOCAB), jnp.float32),
        grid=(LAYERS,),
        in_specs=[
            _const((rows, EMB)),                                   # h0 (fetched once)
            _const((batch, tpad)),                                 # key-padding mask
            _per_layer((1, EMB)), _per_layer((1, EMB)),            # ln1 g / b
            _per_layer((EMB, 3 * EMB)), _per_layer((1, 3 * EMB)),  # qkv w / b
            _per_layer((EMB, EMB)), _per_layer((1, EMB)),          # attn proj w / b
            _per_layer((1, EMB)), _per_layer((1, EMB)),            # ln2 g / b
            _per_layer((EMB, MLP)), _per_layer((1, MLP)),          # mlp fc w / b
            _per_layer((MLP, EMB)), _per_layer((1, EMB)),          # mlp proj w / b
            _const((1, EMB)), _const((1, EMB)),                    # ln_f g / b
            _const((VOCAB, EMB)),                                  # tied LM head (wte)
        ],
        out_specs=_const((rows, VOCAB)),
        scratch_shapes=[pltpu.VMEM((rows, EMB), jnp.float32)],
        compiler_params=pltpu.CompilerParams(dimension_semantics=("arbitrary",)),
    )(h0, mask,
      params["ln1_g"], params["ln1_b"], params["qkv_w"], params["qkv_b"],
      params["proj_w"], params["proj_b"], params["ln2_g"], params["ln2_b"],
      params["mlp_fc_w"], params["mlp_fc_b"], params["mlp_proj_w"], params["mlp_proj_b"],
      params["lnf_g"], params["lnf_b"], params["wte"])


# ---------------- cross-entropy (ignore_index = -100) -------------------------
def _xent_kernel(logits_ref, labels_ref, loss_ref, cnt_ref):
    logits = logits_ref[...]                 # (M, V)
    labels = labels_ref[...]                 # (M, 1) int32, -100 = ignore
    m = jnp.max(logits, axis=-1, keepdims=True)
    lse = m + jnp.log(jnp.sum(jnp.exp(logits - m), axis=-1, keepdims=True))
    vocab_ids = jax.lax.broadcasted_iota(jnp.int32, logits.shape, 1)
    onehot = (vocab_ids == labels).astype(jnp.float32)
    picked = jnp.sum(logits * onehot, axis=-1, keepdims=True)
    valid = (labels != -100).astype(jnp.float32)
    per_row = (lse - picked) * valid
    loss_ref[...] = jnp.sum(per_row, keepdims=True).reshape(1, 1)
    cnt_ref[...] = jnp.sum(valid, keepdims=True).reshape(1, 1)
    # TODO(synk): at real vocab sizes tile this kernel over V with an online LSE.


def cross_entropy_sums(logits, labels):
    M, V = logits.shape
    return pl.pallas_call(
        _xent_kernel,
        out_shape=(jax.ShapeDtypeStruct((1, 1), jnp.float32),
                   jax.ShapeDtypeStruct((1, 1), jnp.float32)),
        grid=(1,),
        in_specs=[pl.BlockSpec((M, V), lambda i: (0, 0)),
                  pl.BlockSpec((M, 1), lambda i: (0, 0))],
        out_specs=(pl.BlockSpec((1, 1), lambda i: (0, 0)),
                   pl.BlockSpec((1, 1), lambda i: (0, 0))),
    )(logits, labels)


# ---------------- parameters ---------------------------------------------------
def init_params(key):
    def nrm(k, shape, scale=0.02, dtype=jnp.float32):
        return (scale * jax.random.normal(k, shape)).astype(dtype)

    keys = iter(jax.random.split(key, 16))
    bf = jnp.bfloat16
    return dict(
        conv_w=nrm(next(keys), (9 * CIN, ENC_DIM), dtype=bf),   # 3x3 conv as matmul
        conv_b=jnp.zeros((1, ENC_DIM), jnp.float32),
        fc_w=nrm(next(keys), (ENC_DIM, EMB), dtype=bf),          # self.fc
        fc_b=jnp.zeros((1, EMB), jnp.float32),
        wte=nrm(next(keys), (VOCAB, EMB), dtype=bf),             # token emb (tied head)
        wpe=nrm(next(keys), (MAXPOS, EMB), 0.01),                # position embeddings
        lnf_g=jnp.ones((1, EMB), jnp.float32),
        lnf_b=jnp.zeros((1, EMB), jnp.float32),
        ln1_g=jnp.ones((LAYERS, 1, EMB), jnp.float32),
        ln1_b=jnp.zeros((LAYERS, 1, EMB), jnp.float32),
        qkv_w=nrm(next(keys), (LAYERS, EMB, 3 * EMB), dtype=bf),
        qkv_b=jnp.zeros((LAYERS, 1, 3 * EMB), jnp.float32),
        proj_w=nrm(next(keys), (LAYERS, EMB, EMB), dtype=bf),
        proj_b=jnp.zeros((LAYERS, 1, EMB), jnp.float32),
        ln2_g=jnp.ones((LAYERS, 1, EMB), jnp.float32),
        ln2_b=jnp.zeros((LAYERS, 1, EMB), jnp.float32),
        mlp_fc_w=nrm(next(keys), (LAYERS, EMB, MLP), dtype=bf),
        mlp_fc_b=jnp.zeros((LAYERS, 1, MLP), jnp.float32),
        mlp_proj_w=nrm(next(keys), (LAYERS, MLP, EMB), dtype=bf),
        mlp_proj_b=jnp.zeros((LAYERS, 1, EMB), jnp.float32),
    )


# ---------------- forward pass --------------------------------------------------
def forward(params, images, input_ids, attention_mask, labels=None):
    Bi = images.shape[0]
    S = input_ids.shape[1]
    T = S + 1                                   # image prefix + tokens
    TPAD = ((T + 7) // 8) * 8                   # sublane-aligned decoder length

    # ---- encoder: conv + ReLU + GAP + fc (one fused Pallas call) ----
    features = encode_images(params, images)                        # (B, EMB) f32

    # ---- decoder inputs: [image feature ; token embeddings] + positions ----
    tok_emb = jnp.take(params["wte"], input_ids, axis=0).astype(jnp.float32)
    emb = jnp.concatenate([features[:, None, :], tok_emb], axis=1)   # (B, T, EMB)
    emb = jnp.pad(emb, ((0, 0), (0, TPAD - T), (0, 0)))              # pad time axis
    h0 = (emb + params["wpe"][:TPAD][None]).reshape(Bi * TPAD, EMB)

    mask = jnp.concatenate([jnp.ones((Bi, 1), jnp.float32),
                            attention_mask.astype(jnp.float32)], axis=1)
    mask = jnp.pad(mask, ((0, 0), (0, TPAD - T)))                    # (B, TPAD)

    # ---- decoder stack + final LN + tied LM head (one fused Pallas call) ----
    logits = run_decoder(params, h0, mask)                           # (B*TPAD, VOCAB)
    logits = logits.reshape(Bi, TPAD, VOCAB)[:, :T, :]

    loss = None
    if labels is not None:
        labels_full = jnp.concatenate(
            [jnp.full((Bi, 1), -100, dtype=labels.dtype), labels], axis=1)   # (B, T)
        shift_logits = logits[:, :-1, :].reshape(-1, VOCAB)
        shift_labels = labels_full[:, 1:].reshape(-1, 1).astype(jnp.int32)
        loss_sum, cnt = cross_entropy_sums(shift_logits, shift_labels)
        loss = loss_sum[0, 0] / cnt[0, 0]
    return loss, logits


# ---------------- main -----------------------------------------------------------
if __name__ == "__main__":
    key = jax.random.PRNGKey(0)
    k_img, k_ids, k_par = jax.random.split(key, 3)

    images = jax.random.normal(k_img, (B, CIN, H, W), jnp.float32)          # NCHW
    input_ids = jax.random.randint(k_ids, (B, SEQ), 0, VOCAB, dtype=jnp.int32)
    attention_mask = jnp.ones((B, SEQ), jnp.float32)
    labels = input_ids  # standard LM-style labels

    params = init_params(k_par)
    loss, logits = forward(params, images, input_ids, attention_mask, labels)
    jax.block_until_ready((loss, logits))

    assert logits.shape == (B, SEQ + 1, VOCAB)
    assert jnp.isfinite(loss)
    print("KERNEL_OK")
</pallas_src>

<mosaic_0001>
module attributes {stable_mosaic.version = 11 : i64} {
  func.func @_encoder_kernel(%arg0: i32, %arg1: memref<1x256x36xbf16, #tpu.memory_space<vmem>>, %arg2: memref<36x32xbf16, #tpu.memory_space<vmem>>, %arg3: memref<1x32xf32, #tpu.memory_space<vmem>>, %arg4: memref<32x32xbf16, #tpu.memory_space<vmem>>, %arg5: memref<1x32xf32, #tpu.memory_space<vmem>>, %arg6: memref<1x1x32xf32, #tpu.memory_space<vmem>>) attributes {dimension_semantics = [#tpu.dimension_semantics<parallel>], iteration_bounds = array<i64: 2>, scalar_prefetch = 0 : i64, scratch_operands = 0 : i64, tpu.core_type = #tpu.core_type<tc>, window_params = [{transform_indices = @transform_0, window_bounds = array<i64: 1, 256, 36>}, {pipeline_mode = #tpu.pipeline_mode<synchronous>, transform_indices = @transform_1, window_bounds = array<i64: 36, 32>}, {pipeline_mode = #tpu.pipeline_mode<synchronous>, transform_indices = @transform_2, window_bounds = array<i64: 1, 32>}, {pipeline_mode = #tpu.pipeline_mode<synchronous>, transform_indices = @transform_3, window_bounds = array<i64: 32, 32>}, {pipeline_mode = #tpu.pipeline_mode<synchronous>, transform_indices = @transform_4, window_bounds = array<i64: 1, 32>}, {transform_indices = @transform_5, window_bounds = array<i64: 1, 1, 32>}]} {
    %c0 = arith.constant 0 : index
    %c0_0 = arith.constant 0 : index
    %c0_1 = arith.constant 0 : index
    %0 = vector.load %arg1[%c0, %c0_0, %c0_1] : memref<1x256x36xbf16, #tpu.memory_space<vmem>>, vector<1x256x36xbf16>
    %1 = vector.shape_cast %0 : vector<1x256x36xbf16> to vector<256x36xbf16>
    %c0_2 = arith.constant 0 : index
    %c0_3 = arith.constant 0 : index
    %2 = vector.load %arg2[%c0_2, %c0_3] : memref<36x32xbf16, #tpu.memory_space<vmem>>, vector<36x32xbf16>
    %cst = arith.constant dense<0.000000e+00> : vector<256x32xf32>
    %3 = tpu.matmul %1, %2, %cst {dimension_numbers = #tpu.dot_dimension_numbers<[1], [0], [0], [1], [0, 0, 1, 1], [], []>} : vector<256x36xbf16>, vector<36x32xbf16>, vector<256x32xf32> -> vector<256x32xf32>
    %c0_4 = arith.constant 0 : index
    %c0_5 = arith.constant 0 : index
    %4 = vector.load %arg3[%c0_4, %c0_5] : memref<1x32xf32, #tpu.memory_space<vmem>>, vector<1x32xf32>
    %5 = vector.broadcast %4 : vector<1x32xf32> to vector<256x32xf32>
    %6 = arith.addf %3, %5 : vector<256x32xf32>
    %cst_6 = arith.constant 0.000000e+00 : f32
    %7 = vector.broadcast %cst_6 : f32 to vector<256x32xf32>
    %8 = arith.maximumf %6, %7 : vector<256x32xf32>
    %cst_7 = arith.constant dense<0.000000e+00> : vector<32xf32>
    %9 = vector.multi_reduction <add>, %8, %cst_7 [0] : vector<256x32xf32> to vector<32xf32>
    %10 = vector.shape_cast %9 : vector<32xf32> to vector<1x32xf32>
    %cst_8 = arith.constant 2.560000e+02 : f32
    %11 = vector.broadcast %cst_8 : f32 to vector<1x32xf32>
    %12 = arith.divf %10, %11 : vector<1x32xf32>
    %13 = arith.truncf %12 : vector<1x32xf32> to vector<1x32xbf16>
    %c0_9 = arith.constant 0 : index
    %c0_10 = arith.constant 0 : index
    %14 = vector.load %arg4[%c0_9, %c0_10] : memref<32x32xbf16, #tpu.memory_space<vmem>>, vector<32x32xbf16>
    %cst_11 = arith.constant dense<0.000000e+00> : vector<1x32xf32>
    %15 = tpu.matmul %13, %14, %cst_11 {dimension_numbers = #tpu.dot_dimension_numbers<[1], [0], [0], [1], [0, 0, 1, 1], [], []>} : vector<1x32xbf16>, vector<32x32xbf16>, vector<1x32xf32> -> vector<1x32xf32>
    %c0_12 = arith.constant 0 : index
    %c0_13 = arith.constant 0 : index
    %16 = vector.load %arg5[%c0_12, %c0_13] : memref<1x32xf32, #tpu.memory_space<vmem>>, vector<1x32xf32>
    %17 = arith.addf %15, %16 : vector<1x32xf32>
    %c0_14 = arith.constant 0 : index
    %c0_15 = arith.constant 0 : index
    %c0_16 = arith.constant 0 : index
    %18 = vector.load %arg6[%c0_14, %c0_15, %c0_16] : memref<1x1x32xf32, #tpu.memory_space<vmem>>, vector<1x1x32xf32>
    %19 = vector.shape_cast %18 : vector<1x1x32xf32> to vector<1x32xf32>
    %20 = vector.shape_cast %17 : vector<1x32xf32> to vector<1x1x32xf32>
    tpu.vector_store %arg6[%c0_14, %c0_15, %c0_16], %20 {strides = array<i32>} : memref<1x1x32xf32, #tpu.memory_space<vmem>>, vector<1x1x32xf32>,
    return
  }
  func.func @transform_0(%arg0: i32) -> (i32, i32, i32) {
    %c0_i32 = arith.constant 0 : i32
    %c0_i32_0 = arith.constant 0 : i32
    %c0_i32_1 = arith.constant 0 : i32
    return %arg0, %c0_i32, %c0_i32_0 : i32, i32, i32
  }
  func.func @transform_1(%arg0: i32) -> (i32, i32) {
    %c0_i32 = arith.constant 0 : i32
    %c0_i32_0 = arith.constant 0 : i32
    %c0_i32_1 = arith.constant 0 : i32
    return %c0_i32, %c0_i32_0 : i32, i32
  }
  func.func @transform_2(%arg0: i32) -> (i32, i32) {
    %c0_i32 = arith.constant 0 : i32
    %c0_i32_0 = arith.constant 0 : i32
    %c0_i32_1 = arith.constant 0 : i32
    return %c0_i32, %c0_i32_0 : i32, i32
  }
  func.func @transform_3(%arg0: i32) -> (i32, i32) {
    %c0_i32 = arith.constant 0 : i32
    %c0_i32_0 = arith.constant 0 : i32
    %c0_i32_1 = arith.constant 0 : i32
    return %c0_i32, %c0_i32_0 : i32, i32
  }
  func.func @transform_4(%arg0: i32) -> (i32, i32) {
    %c0_i32 = arith.constant 0 : i32
    %c0_i32_0 = arith.constant 0 : i32
    %c0_i32_1 = arith.constant 0 : i32
    return %c0_i32, %c0_i32_0 : i32, i32
  }
  func.func @transform_5(%arg0: i32) -> (i32, i32, i32) {
    %c0_i32 = arith.constant 0 : i32
    %c0_i32_0 = arith.constant 0 : i32
    %c0_i32_1 = arith.constant 0 : i32
    return %arg0, %c0_i32, %c0_i32_0 : i32, i32, i32
  }
}

</mosaic_0001>

<llo_original>
// kernel: tpu_custom_call.1
$region0: #{tpu_custom_call.1}
  #allocation0 [shape = 'u32[]', space=smem, size = 0x4, offset = 0x4, fixed_abs, tag = 'smem constant byte address 0x4 - core index']
  #allocation1 [shape = 'u32[144,128]{1,0:T(1,128)}', space=vmem, size = 0x12000, scoped, tag = 'internal scratch']
  %s0 = inlined_call_operand.vmem [shape: bf16[2,256,36], index: 0, kind: input, shape index: {}]
  %s1 = inlined_call_operand.vmem [shape: bf16[36,32], index: 1, kind: input, shape index: {}]
  %s2 = inlined_call_operand.vmem [shape: f32[1,32], index: 2, kind: input, shape index: {}]
  %s3 = inlined_call_operand.vmem [shape: bf16[32,32], index: 3, kind: input, shape index: {}]
  %s4 = inlined_call_operand.vmem [shape: f32[1,32], index: 4, kind: input, shape index: {}]
  %s5 = inlined_call_operand.hbm [shape: f32[2,1,32], index: 5, kind: output, shape index: {}]
  %s6 = sld [smem:[#allocation0]]
  $region53: #{tpu_custom_call.1} parent=0
    _
  %s8 = ssub.s32 1, %s6
  %s9 = scalar_select 0, %s8, %s6
  $region1: #{tpu_custom_call.1} parent=0
    #allocation2 [shape = 'u8[1024]{0}', space=vmem, size = 0x400, scoped, tag = 'output window, operand 0']
    #allocation3 [shape = 's32[2]{0}', space=sflag, size = 0x8, scoped, tag = 'scoped memory for tpu_custom_call.1']
    %10 = vsyncpa [#allocation3], 0
    %s11 = scalar_lea.sflag [#allocation3], 1
    %12 = vsyncpa %s11, 0
    loop: start=0, step=1, limit=4
    $region2: #{tpu_custom_call.1} parent=1 // loop_pre_header
      _
    $region3: #{tpu_custom_call.1} parent=1 // loop_header
      %s14 = sphi 0, %s18
      %p15 = scmp.ge.s32.totalorder %s14, 4
      %s24 = sphi 0, %s26
      %s27 = sphi 0, %s24
      %s28 = sphi 0, %s27
      %s44 = sphi 0, %s28
      %s48 = sphi 0, %s48
      %s50 = sphi 0, %s48
      %s51 = sphi 0, %s50
      %s65 = sphi 0, %s51
      %s69 = sphi 0, %s69
      %s71 = sphi 0, %s69
      %s72 = sphi 0, %s71
      %s86 = sphi 0, %s72
      %s90 = sphi 0, %s90
      %s92 = sphi 0, %s90
      %s93 = sphi 0, %s92
      %s107 = sphi 0, %s93
      %s111 = sphi 0, %s111
      %s113 = sphi 0, %s111
      %s114 = sphi 0, %s113
      %s128 = sphi 0, %s114
      %s134 = sphi 0, %s136
      %s137 = sphi 0, %s134
      %s138 = sphi 0, %s137
      %s154 = sphi 0, %s138
    $region4: #{tpu_custom_call.1} parent=1 // loop_header_branch
      %17 = sbr.rel (%p15) target = $region8
    $region5: #{tpu_custom_call.1} parent=1 // loop_body
      %s19 = ssub.s32 %s14, 1
      %s20 = ssub.s32 %s14, 2
      %s21 = sadd.s32 %s14, 1
      %s22 = ssub.s32 %s14, %s21
      %p23 = scmp.eq.s32.totalorder %s22, 0
      %s25 = sadd.s32 %s24, 1
      %s26 = scalar_select %p23, %s24, %s25
      %p29 = pneg %p23
      %p30 = scmp.eq.s32.totalorder %s14, 1
      %p31 = por %p29, %p30
      %p32 = scmp.ne.s32.totalorder %s24, %s27
      %p33 = scmp.eq.s32.totalorder %s14, 0
      %p34 = por %p32, %p33
      %p35 = scmp.ne.s32.totalorder %s24, %s27
      %p36 = scmp.eq.s32.totalorder %s19, 1
      %p37 = por %p35, %p36
      %p38 = scmp.ne.s32.totalorder %s27, %s28
      %p39 = scmp.eq.s32.totalorder %s19, 0
      %p40 = por %p38, %p39
      %p41 = scmp.ne.s32.totalorder %s27, %s28
      %p42 = scmp.eq.s32.totalorder %s20, 1
      %p43 = por %p41, %p42
      %p45 = scmp.ne.s32.totalorder %s28, %s44
      %p46 = scmp.eq.s32.totalorder %s20, 0
      %p47 = por %p45, %p46
      %s49 = sadd.s32 %s48, 1
      %p52 = scmp.eq.s32.totalorder %s14, 1
      %p53 = scmp.ne.s32.totalorder %s48, %s50
      %p54 = scmp.eq.s32.totalorder %s14, 0
      %p55 = por %p53, %p54
      %p56 = scmp.ne.s32.totalorder %s48, %s50
      %p57 = scmp.eq.s32.totalorder %s19, 1
      %p58 = por %p56, %p57
      %p59 = scmp.ne.s32.totalorder %s50, %s51
      %p60 = scmp.eq.s32.totalorder %s19, 0
      %p61 = por %p59, %p60
      %p62 = scmp.ne.s32.totalorder %s50, %s51
      %p63 = scmp.eq.s32.totalorder %s20, 1
      %p64 = por %p62, %p63
      %p66 = scmp.ne.s32.totalorder %s51, %s65
      %p67 = scmp.eq.s32.totalorder %s20, 0
      %p68 = por %p66, %p67
      %s70 = sadd.s32 %s69, 1
      %p73 = scmp.eq.s32.totalorder %s14, 1
      %p74 = scmp.ne.s32.totalorder %s69, %s71
      %p75 = scmp.eq.s32.totalorder %s14, 0
      %p76 = por %p74, %p75
      %p77 = scmp.ne.s32.totalorder %s69, %s71
      %p78 = scmp.eq.s32.totalorder %s19, 1
      %p79 = por %p77, %p78
      %p80 = scmp.ne.s32.totalorder %s71, %s72
      %p81 = scmp.eq.s32.totalorder %s19, 0
      %p82 = por %p80, %p81
      %p83 = scmp.ne.s32.totalorder %s71, %s72
      %p84 = scmp.eq.s32.totalorder %s20, 1
      %p85 = por %p83, %p84
      %p87 = scmp.ne.s32.totalorder %s72, %s86
      %p88 = scmp.eq.s32.totalorder %s20, 0
      %p89 = por %p87, %p88
      %s91 = sadd.s32 %s90, 1
      %p94 = scmp.eq.s32.totalorder %s14, 1
      %p95 = scmp.ne.s32.totalorder %s90, %s92
      %p96 = scmp.eq.s32.totalorder %s14, 0
      %p97 = por %p95, %p96
      %p98 = scmp.ne.s32.totalorder %s90, %s92
      %p99 = scmp.eq.s32.totalorder %s19, 1
      %p100 = por %p98, %p99
      %p101 = scmp.ne.s32.totalorder %s92, %s93
      %p102 = scmp.eq.s32.totalorder %s19, 0
      %p103 = por %p101, %p102
      %p104 = scmp.ne.s32.totalorder %s92, %s93
      %p105 = scmp.eq.s32.totalorder %s20, 1
      %p106 = por %p104, %p105
      %p108 = scmp.ne.s32.totalorder %s93, %s107
      %p109 = scmp.eq.s32.totalorder %s20, 0
      %p110 = por %p108, %p109
      %s112 = sadd.s32 %s111, 1
      %p115 = scmp.eq.s32.totalorder %s14, 1
      %p116 = scmp.ne.s32.totalorder %s111, %s113
      %p117 = scmp.eq.s32.totalorder %s14, 0
      %p118 = por %p116, %p117
      %p119 = scmp.ne.s32.totalorder %s111, %s113
      %p120 = scmp.eq.s32.totalorder %s19, 1
      %p121 = por %p119, %p120
      %p122 = scmp.ne.s32.totalorder %s113, %s114
      %p123 = scmp.eq.s32.totalorder %s19, 0
      %p124 = por %p122, %p123
      %p125 = scmp.ne.s32.totalorder %s113, %s114
      %p126 = scmp.eq.s32.totalorder %s20, 1
      %p127 = por %p125, %p126
      %p129 = scmp.ne.s32.totalorder %s114, %s128
      %p130 = scmp.eq.s32.totalorder %s20, 0
      %p131 = por %p129, %p130
      %s132 = ssub.s32 %s14, %s21
      %p133 = scmp.eq.s32.totalorder %s132, 0
      %s135 = sadd.s32 %s134, 1
      %s136 = scalar_select %p133, %s134, %s135
      %p139 = pneg %p133
      %p140 = scmp.eq.s32.totalorder %s14, 1
      %p141 = por %p139, %p140
      %p142 = scmp.ne.s32.totalorder %s134, %s137
      %p143 = scmp.eq.s32.totalorder %s14, 0
      %p144 = por %p142, %p143
      %p145 = scmp.ne.s32.totalorder %s134, %s137
      %p146 = scmp.eq.s32.totalorder %s19, 1
      %p147 = por %p145, %p146
      %p148 = scmp.ne.s32.totalorder %s137, %s138
      %p149 = scmp.eq.s32.totalorder %s19, 0
      %p150 = por %p148, %p149
      %p151 = scmp.ne.s32.totalorder %s137, %s138
      %p152 = scmp.eq.s32.totalorder %s20, 1
      %p153 = por %p151, %p152
      %p155 = scmp.ne.s32.totalorder %s138, %s154
      %p156 = scmp.eq.s32.totalorder %s20, 0
      %p157 = por %p155, %p156
      %p158 = scmp.le.s32.totalorder 1, %s14
      %p159 = scmp.lt.s32.totalorder %s14, 3
      %p160 = pnand %p158, %p159
      %p161 = pneg %p160
      // Predicated region
      $region9: #{tpu_custom_call.1} parent=5 // pred_check
        _
      $region10: #{tpu_custom_call.1} parent=5 // pred_check_branch
        %163 = sbr.rel (%p160) target = $region12
      $region11: #{tpu_custom_call.1} parent=5 // pred_region
        %s164 = ssub.s32 %s14, 1
        // Predicated region
        $region13: #{tpu_custom_call.1} parent=11 // pred_check
          %p165 = pneg %p61
        $region14: #{tpu_custom_call.1} parent=11 // pred_check_branch
          %167 = sbr.rel (%p165) target = $region16
        $region15: #{tpu_custom_call.1} parent=11 // pred_region
          _
        $region16: #{tpu_custom_call.1} parent=11 // pred_fallthru
          _
        // Predicated region
        $region17: #{tpu_custom_call.1} parent=11 // pred_check
          %p168 = pneg %p82
        $region18: #{tpu_custom_call.1} parent=11 // pred_check_branch
          %170 = sbr.rel (%p168) target = $region20
        $region19: #{tpu_custom_call.1} parent=11 // pred_region
          _
        $region20: #{tpu_custom_call.1} parent=11 // pred_fallthru
          _
        // Predicated region
        $region21: #{tpu_custom_call.1} parent=11 // pred_check
          %p171 = pneg %p103
        $region22: #{tpu_custom_call.1} parent=11 // pred_check_branch
          %173 = sbr.rel (%p171) target = $region24
        $region23: #{tpu_custom_call.1} parent=11 // pred_region
          _
        $region24: #{tpu_custom_call.1} parent=11 // pred_fallthru
          _
        // Predicated region
        $region25: #{tpu_custom_call.1} parent=11 // pred_check
          %p174 = pneg %p124
        $region26: #{tpu_custom_call.1} parent=11 // pred_check_branch
          %176 = sbr.rel (%p174) target = $region28
        $region27: #{tpu_custom_call.1} parent=11 // pred_region
          _
        $region28: #{tpu_custom_call.1} parent=11 // pred_fallthru
          _
      $region12: #{tpu_custom_call.1} parent=5 // pred_fallthru
        _
      %p177 = scmp.lt.s32.totalorder %s14, 2
      // Predicated region
      $region29: #{tpu_custom_call.1} parent=5 // pred_check
        %p178 = pneg %p177
      $region30: #{tpu_custom_call.1} parent=5 // pred_check_branch
        %180 = sbr.rel (%p178) target = $region32
      $region31: #{tpu_custom_call.1} parent=5 // pred_region
        // Predicated region
        $region33: #{tpu_custom_call.1} parent=31 // pred_check
          %p181 = pneg %p34
        $region34: #{tpu_custom_call.1} parent=31 // pred_check_branch
          %183 = sbr.rel (%p181) target = $region36
        $region35: #{tpu_custom_call.1} parent=31 // pred_region
          %p184 = scmp.lt.s32.totalorder %s14, 1
          %s185 = scalar_select %p184, %s14, 1
          %s186 = smul.addr %s185, 32
          %s187 = smul.addr %s186, 4
          %s188 = scalar_lea.vmem %s0, %s187
        $region36: #{tpu_custom_call.1} parent=31 // pred_fallthru
          _
      $region32: #{tpu_custom_call.1} parent=5 // pred_fallthru
        _
      %p189 = scmp.le.s32.totalorder 1, %s14
      %p190 = scmp.lt.s32.totalorder %s14, 3
      %p191 = pnand %p189, %p190
      %p192 = pneg %p191
      // Predicated region
      $region37: #{tpu_custom_call.1} parent=5 // pred_check
        _
      $region38: #{tpu_custom_call.1} parent=5 // pred_check_branch
        %194 = sbr.rel (%p191) target = $region40
      $region39: #{tpu_custom_call.1} parent=5 // pred_region
        %s195 = ssub.s32 %s14, 1
        %p196 = scmp.lt.s32.totalorder %s19, 1
        %s197 = scalar_select %p196, %s19, 1
        %s198 = smul.addr %s197, 32
        %s199 = smul.addr %s198, 4
        %s200 = scalar_lea.vmem %s0, %s199
        %p201 = pneg %p40
        %p202 = pneg %p37
        %p203 = pneg %p61
        %p204 = pneg %p58
        %p205 = pneg %p82
        %p206 = pneg %p79
        %p207 = pneg %p103
        %p208 = pneg %p100
        %p209 = pneg %p124
        %p210 = pneg %p121
        %p211 = pneg %p150
        %p212 = pneg %p147
        %s213 = sand.u32 %s137, 1
        %s214 = scalar_lea.sflag [#allocation3], %s213
        %s215 = sand.u32 %s137, 1
        %s216 = scalar_lea.vmem [#allocation2], %s215
        %p217 = scmp.lt.s32.totalorder %s19, 1
        %s218 = scalar_select %p217, %s19, 1
        %s219 = smul.addr %s218, 32
        %s220 = smul.addr %s219, 4
        %s221 = scalar_lea.vmem %s0, %s220
        %v223 = vld [vmem:[%s221] sm:$0xf]
        %v224 = vld [vmem:[%s221 + $0x4] sm:$0xf]
        %v225 = vld [vmem:[%s221 + $0x8] sm:$0xf]
        %v226 = vld [vmem:[%s221 + $0xc] sm:$0xf]
        %v227 = vld [vmem:[%s221 + $0x10] sm:$0xf]
        %v228 = vld [vmem:[%s221 + $0x14] sm:$0xf]
        %v229 = vld [vmem:[%s221 + $0x18] sm:$0xf]
        %v230 = vld [vmem:[%s221 + $0x1c] sm:$0xf]
        %v231 = vld [vmem:[%s221 + $0x20] sm:$0xf]
        %v232 = vld [vmem:[%s221 + $0x24] sm:$0xf]
        %v233 = vld [vmem:[%s221 + $0x28] sm:$0xf]
        %v234 = vld [vmem:[%s221 + $0x2c] sm:$0xf]
        %v235 = vld [vmem:[%s221 + $0x30] sm:$0xf]
        %v236 = vld [vmem:[%s221 + $0x34] sm:$0xf]
        %v237 = vld [vmem:[%s221 + $0x38] sm:$0xf]
        %v238 = vld [vmem:[%s221 + $0x3c] sm:$0xf]
        %v239 = vld [vmem:[%s221 + $0x40] sm:$0xf]
        %v240 = vld [vmem:[%s221 + $0x44] sm:$0xf]
        %v241 = vld [vmem:[%s221 + $0x48] sm:$0xf]
        %v242 = vld [vmem:[%s221 + $0x4c] sm:$0xf]
        %v243 = vld [vmem:[%s221 + $0x50] sm:$0xf]
        %v244 = vld [vmem:[%s221 + $0x54] sm:$0xf]
        %v245 = vld [vmem:[%s221 + $0x58] sm:$0xf]
        %v246 = vld [vmem:[%s221 + $0x5c] sm:$0xf]
        %v247 = vld [vmem:[%s221 + $0x60] sm:$0xf]
        %v248 = vld [vmem:[%s221 + $0x64] sm:$0xf]
        %v249 = vld [vmem:[%s221 + $0x68] sm:$0xf]
        %v250 = vld [vmem:[%s221 + $0x6c] sm:$0xf]
        %v251 = vld [vmem:[%s221 + $0x70] sm:$0xf]
        %v252 = vld [vmem:[%s221 + $0x74] sm:$0xf]
        %v253 = vld [vmem:[%s221 + $0x78] sm:$0xf]
        %v254 = vld [vmem:[%s221 + $0x7c] sm:$0xf]
        %v255 = vld [vmem:[%s1] sm:$0xf]
        %v256 = vld [vmem:[%s1 + $0x4] sm:$0xf]
        %v257 = vld [vmem:[%s1 + $0x8] sm:$0xf]
        %v258 = vld [vmem:[%s1 + $0xc] sm:$0xf]
        %v259 = vld [vmem:[%s1 + $0x10] sm:$0x3]
        %v260 = vld [vmem:[%s2] sm:$0x1]
        %v262 = vlaneseq
        %v263 = vshrl.u32 %v262, 7
        %v264 = vsub.s32 0, %v263
        %v265 = vrot.slane %v260, %v264
        %v299 = vunpack.c.l.b16 %v223
        %v300 = vunpack.c.l.b16 %v224
        %v301 = vunpack.c.l.b16 %v225
        %v302 = vunpack.c.l.b16 %v226
        %v303 = vunpack.c.l.b16 %v227
        %v304 = vunpack.c.l.b16 %v228
        %v305 = vunpack.c.l.b16 %v229
        %v306 = vunpack.c.l.b16 %v230
        %v307 = vunpack.c.l.b16 %v231
        %v308 = vunpack.c.l.b16 %v232
        %v309 = vunpack.c.l.b16 %v233
        %v310 = vunpack.c.l.b16 %v234
        %v311 = vunpack.c.l.b16 %v235
        %v312 = vunpack.c.l.b16 %v236
        %v313 = vunpack.c.l.b16 %v237
        %v314 = vunpack.c.l.b16 %v238
        %v315 = vunpack.c.l.b16 %v239
        %v316 = vunpack.c.l.b16 %v240
        %v317 = vunpack.c.l.b16 %v241
        %v318 = vunpack.c.l.b16 %v242
        %v319 = vunpack.c.l.b16 %v243
        %v320 = vunpack.c.l.b16 %v244
        %v321 = vunpack.c.l.b16 %v245
        %v322 = vunpack.c.l.b16 %v246
        %v323 = vunpack.c.l.b16 %v247
        %v324 = vunpack.c.l.b16 %v248
        %v325 = vunpack.c.l.b16 %v249
        %v326 = vunpack.c.l.b16 %v250
        %v327 = vunpack.c.l.b16 %v251
        %v328 = vunpack.c.l.b16 %v252
        %v329 = vunpack.c.l.b16 %v253
        %v330 = vunpack.c.l.b16 %v254
        %v331 = vpack.c.b16 %v300, %v299
        %v332 = vpack.c.b16 %v302, %v301
        %v333 = vpack.c.b16 %v304, %v303
        %v334 = vpack.c.b16 %v306, %v305
        %v335 = vpack.c.b16 %v308, %v307
        %v336 = vpack.c.b16 %v310, %v309
        %v337 = vpack.c.b16 %v312, %v311
        %v338 = vpack.c.b16 %v314, %v313
        %v339 = vpack.c.b16 %v316, %v315
        %v340 = vpack.c.b16 %v318, %v317
        %v341 = vpack.c.b16 %v320, %v319
        %v342 = vpack.c.b16 %v322, %v321
        %v343 = vpack.c.b16 %v324, %v323
        %v344 = vpack.c.b16 %v326, %v325
        %v345 = vpack.c.b16 %v328, %v327
        %v346 = vpack.c.b16 %v330, %v329
        %v352 = vunpack.c.l.b16 %v255
        %v353 = vunpack.c.l.b16 %v256
        %v354 = vunpack.c.l.b16 %v257
        %v355 = vunpack.c.l.b16 %v258
        %v356 = vunpack.c.l.b16 %v259
        %v357 = vpack.c.b16 %v353, %v352
        %v358 = vpack.c.b16 %v355, %v354
        %v359 = vpack.c.b16 %v356, %v356
        %vm362 = vcmask 293888
        %v364 = vsel %vm362, %v331, 0
        %v367 = vsel %vm362, %v332, 0
        %v370 = vsel %vm362, %v333, 0
        %v373 = vsel %vm362, %v334, 0
        %v376 = vsel %vm362, %v335, 0
        %v379 = vsel %vm362, %v336, 0
        %v382 = vsel %vm362, %v337, 0
        %v385 = vsel %vm362, %v338, 0
        %v388 = vsel %vm362, %v339, 0
        %v391 = vsel %vm362, %v340, 0
        %v394 = vsel %vm362, %v341, 0
        %v397 = vsel %vm362, %v342, 0
        %v400 = vsel %vm362, %v343, 0
        %v403 = vsel %vm362, %v344, 0
        %v406 = vsel %vm362, %v345, 0
        %v409 = vsel %vm362, %v346, 0
        %vm411 = vcmask 1041408
        %v413 = vsel %vm411, %v359, 0
        %415 = vmatprep.subr.bf16.mxu0 0
        %416 = vmatpush1.bf16.msra.mxu0 0
        %417 = vmatprep.subr.bf16.mxu0 0
        %418 = vmatpush1.bf16.msra.mxu0 0
        %419 = vmatprep.subr.bf16.mxu0 0
        %420 = vmatpush1.bf16.msra.mxu0 0
        %421 = vmatprep.subr.bf16.mxu0 0
        %422 = vmatpush1.bf16.msra.mxu0 0
        %423 = vmatprep.subr.bf16.mxu0 0
        %424 = vmatpush1.bf16.msra.mxu0 0
        %425 = vmatprep.subr.bf16.mxu0 0
        %426 = vmatpush1.bf16.msra.mxu0 %v413
        %427 = vmatprep.subr.bf16.mxu0 0
        %428 = vmatpush1.bf16.msra.mxu0 %v358
        %429 = vmatprep.subr.bf16.mxu0 0
        %430 = vmatpush1.bf16.msra.mxu0 %v357
        %431 = vmatprep.subr.bf16.mxu0 0
        %432 = vmatpush2.bf16.msra.mxu0 0
        %433 = vmatprep.subr.bf16.mxu0 0
        %434 = vmatpush2.bf16.msra.mxu0 0
        %435 = vmatprep.subr.bf16.mxu0 0
        %436 = vmatpush2.bf16.msra.mxu0 0
        %437 = vmatprep.subr.bf16.mxu0 0
        %438 = vmatpush2.bf16.msra.mxu0 0
        %439 = vmatprep.subr.bf16.mxu0 0
        %440 = vmatpush2.bf16.msra.mxu0 0
        %441 = vmatprep.subr.bf16.mxu0 0
        %442 = vmatpush2.bf16.msra.mxu0 0
        %443 = vmatprep.subr.bf16.mxu0 0
        %444 = vmatpush2.bf16.msra.mxu0 0
        %445 = vmatprep.subr.bf16.mxu0 0
        %446 = vmatpush2.bf16.msra.mxu0 0
        %447 = vmatprep.mubr.bf16.mxu0 0
        %448 = vmatmul.mubr.bf16.gmra.mxu0 %v364
        %v449 = vpop.f32.mrf.mxu0
        %v450 = vadd.f32 %v265, %v449
        %v451 = vpop.f32.mrf.mxu0
        %v452 = vpop.f32.mrf.mxu0
        %v453 = vadd.f32 %v265, %v452
        %v454 = vpop.f32.mrf.mxu0
        %455 = vmatprep.mubr.bf16.mxu0 0
        %456 = vmatmul.mubr.bf16.gmra.mxu0 %v367
        %v457 = vpop.f32.mrf.mxu0
        %v458 = vadd.f32 %v265, %v457
        %v459 = vpop.f32.mrf.mxu0
        %v460 = vpop.f32.mrf.mxu0
        %v461 = vadd.f32 %v265, %v460
        %v462 = vpop.f32.mrf.mxu0
        %463 = vmatprep.mubr.bf16.mxu0 0
        %464 = vmatmul.mubr.bf16.gmra.mxu0 %v370
        %v465 = vpop.f32.mrf.mxu0
        %v466 = vadd.f32 %v265, %v465
        %v467 = vpop.f32.mrf.mxu0
        %v468 = vpop.f32.mrf.mxu0
        %v469 = vadd.f32 %v265, %v468
        %v470 = vpop.f32.mrf.mxu0
        %471 = vmatprep.mubr.bf16.mxu0 0
        %472 = vmatmul.mubr.bf16.gmra.mxu0 %v373
        %v473 = vpop.f32.mrf.mxu0
        %v474 = vadd.f32 %v265, %v473
        %v475 = vpop.f32.mrf.mxu0
        %v476 = vpop.f32.mrf.mxu0
        %v477 = vadd.f32 %v265, %v476
        %v478 = vpop.f32.mrf.mxu0
        %479 = vmatprep.mubr.bf16.mxu0 0
        %480 = vmatmul.mubr.bf16.gmra.mxu0 %v376
        %v481 = vpop.f32.mrf.mxu0
        %v482 = vadd.f32 %v265, %v481
        %v483 = vpop.f32.mrf.mxu0
        %v484 = vpop.f32.mrf.mxu0
        %v485 = vadd.f32 %v265, %v484
        %v486 = vpop.f32.mrf.mxu0
        %487 = vmatprep.mubr.bf16.mxu0 0
        %488 = vmatmul.mubr.bf16.gmra.mxu0 %v379
        %v489 = vpop.f32.mrf.mxu0
        %v490 = vadd.f32 %v265, %v489
        %v491 = vpop.f32.mrf.mxu0
        %v492 = vpop.f32.mrf.mxu0
        %v493 = vadd.f32 %v265, %v492
        %v494 = vpop.f32.mrf.mxu0
        %495 = vmatprep.mubr.bf16.mxu0 0
        %496 = vmatmul.mubr.bf16.gmra.mxu0 %v382
        %v497 = vpop.f32.mrf.mxu0
        %v498 = vadd.f32 %v265, %v497
        %v499 = vpop.f32.mrf.mxu0
        %v500 = vpop.f32.mrf.mxu0
        %v501 = vadd.f32 %v265, %v500
        %v502 = vpop.f32.mrf.mxu0
        %503 = vmatprep.mubr.bf16.mxu0 0
        %504 = vmatmul.mubr.bf16.gmra.mxu0 %v385
        %v505 = vpop.f32.mrf.mxu0
        %v506 = vadd.f32 %v265, %v505
        %v507 = vpop.f32.mrf.mxu0
        %v508 = vpop.f32.mrf.mxu0
        %v509 = vadd.f32 %v265, %v508
        %v510 = vpop.f32.mrf.mxu0
        %511 = vmatprep.mubr.bf16.mxu0 0
        %512 = vmatmul.mubr.bf16.gmra.mxu0 %v388
        %v513 = vpop.f32.mrf.mxu0
        %v514 = vadd.f32 %v265, %v513
        %v515 = vpop.f32.mrf.mxu0
        %v516 = vpop.f32.mrf.mxu0
        %v517 = vadd.f32 %v265, %v516
        %v518 = vpop.f32.mrf.mxu0
        %519 = vmatprep.mubr.bf16.mxu0 0
        %520 = vmatmul.mubr.bf16.gmra.mxu0 %v391
        %v521 = vpop.f32.mrf.mxu0
        %v522 = vadd.f32 %v265, %v521
        %v523 = vpop.f32.mrf.mxu0
        %v524 = vpop.f32.mrf.mxu0
        %v525 = vadd.f32 %v265, %v524
        %v526 = vpop.f32.mrf.mxu0
        %527 = vmatprep.mubr.bf16.mxu0 0
        %528 = vmatmul.mubr.bf16.gmra.mxu0 %v394
        %v529 = vpop.f32.mrf.mxu0
        %v530 = vadd.f32 %v265, %v529
        %v531 = vpop.f32.mrf.mxu0
        %v532 = vpop.f32.mrf.mxu0
        %v533 = vadd.f32 %v265, %v532
        %v534 = vpop.f32.mrf.mxu0
        %535 = vmatprep.mubr.bf16.mxu0 0
        %536 = vmatmul.mubr.bf16.gmra.mxu0 %v397
        %v537 = vpop.f32.mrf.mxu0
        %v538 = vadd.f32 %v265, %v537
        %v539 = vpop.f32.mrf.mxu0
        %v540 = vpop.f32.mrf.mxu0
        %v541 = vadd.f32 %v265, %v540
        %v542 = vpop.f32.mrf.mxu0
        %543 = vmatprep.mubr.bf16.mxu0 0
        %544 = vmatmul.mubr.bf16.gmra.mxu0 %v400
        %v545 = vpop.f32.mrf.mxu0
        %v546 = vadd.f32 %v265, %v545
        %v547 = vpop.f32.mrf.mxu0
        %v548 = vpop.f32.mrf.mxu0
        %v549 = vadd.f32 %v265, %v548
        %v550 = vpop.f32.mrf.mxu0
        %551 = vmatprep.mubr.bf16.mxu0 0
        %552 = vmatmul.mubr.bf16.gmra.mxu0 %v403
        %v553 = vpop.f32.mrf.mxu0
        %v554 = vadd.f32 %v265, %v553
        %v555 = vpop.f32.mrf.mxu0
        %v556 = vpop.f32.mrf.mxu0
        %v557 = vadd.f32 %v265, %v556
        %v558 = vpop.f32.mrf.mxu0
        %559 = vmatprep.mubr.bf16.mxu0 0
        %560 = vmatmul.mubr.bf16.gmra.mxu0 %v406
        %v561 = vpop.f32.mrf.mxu0
        %v562 = vadd.f32 %v265, %v561
        %v563 = vpop.f32.mrf.mxu0
        %v564 = vpop.f32.mrf.mxu0
        %v565 = vadd.f32 %v265, %v564
        %v566 = vpop.f32.mrf.mxu0
        %567 = vmatprep.mubr.bf16.mxu0 0
        %568 = vmatmul.mubr.bf16.gmra.mxu0 %v409
        %v569 = vpop.f32.mrf.mxu0
        %v570 = vadd.f32 %v265, %v569
        %v571 = vpop.f32.mrf.mxu0
        %v572 = vpop.f32.mrf.mxu0
        %v573 = vadd.f32 %v265, %v572
        %v574 = vpop.f32.mrf.mxu0
        %575 = vdwg.mxu0
        %v576 = vmax.f32 %v450, 0.0
        %v577 = vmax.f32 %v453, 0.0
        %v578 = vmax.f32 %v458, 0.0
        %v579 = vmax.f32 %v461, 0.0
        %v580 = vmax.f32 %v466, 0.0
        %v581 = vmax.f32 %v469, 0.0
        %v582 = vmax.f32 %v474, 0.0
        %v583 = vmax.f32 %v477, 0.0
        %v584 = vmax.f32 %v482, 0.0
        %v585 = vmax.f32 %v485, 0.0
        %v586 = vmax.f32 %v490, 0.0
        %v587 = vmax.f32 %v493, 0.0
        %v588 = vmax.f32 %v498, 0.0
        %v589 = vmax.f32 %v501, 0.0
        %v590 = vmax.f32 %v506, 0.0
        %v591 = vmax.f32 %v509, 0.0
        %v592 = vmax.f32 %v514, 0.0
        %v593 = vmax.f32 %v517, 0.0
        %v594 = vmax.f32 %v522, 0.0
        %v595 = vmax.f32 %v525, 0.0
        %v596 = vmax.f32 %v530, 0.0
        %v597 = vmax.f32 %v533, 0.0
        %v598 = vmax.f32 %v538, 0.0
        %v599 = vmax.f32 %v541, 0.0
        %v600 = vmax.f32 %v546, 0.0
        %v601 = vmax.f32 %v549, 0.0
        %v602 = vmax.f32 %v554, 0.0
        %v603 = vmax.f32 %v557, 0.0
        %v604 = vmax.f32 %v562, 0.0
        %v605 = vmax.f32 %v565, 0.0
        %v606 = vmax.f32 %v570, 0.0
        %v607 = vmax.f32 %v573, 0.0
        %vm608 = vcmask 261120
        %v609 = vsel %vm608, %v576, 0.0
        %v610 = vsel %vm608, %v577, 0.0
        %v611 = vadd.f32 %v609, %v610
        %v612 = vsel %vm608, %v578, 0.0
        %v613 = vadd.f32 %v611, %v612
        %v614 = vsel %vm608, %v579, 0.0
        %v615 = vadd.f32 %v613, %v614
        %v616 = vsel %vm608, %v580, 0.0
        %v617 = vadd.f32 %v615, %v616
        %v618 = vsel %vm608, %v581, 0.0
        %v619 = vadd.f32 %v617, %v618
        %v620 = vsel %vm608, %v582, 0.0
        %v621 = vadd.f32 %v619, %v620
        %v622 = vsel %vm608, %v583, 0.0
        %v623 = vadd.f32 %v621, %v622
        %v624 = vsel %vm608, %v584, 0.0
        %v625 = vadd.f32 %v623, %v624
        %v626 = vsel %vm608, %v585, 0.0
        %v627 = vadd.f32 %v625, %v626
        %v628 = vsel %vm608, %v586, 0.0
        %v629 = vadd.f32 %v627, %v628
        %v630 = vsel %vm608, %v587, 0.0
        %v631 = vadd.f32 %v629, %v630
        %v632 = vsel %vm608, %v588, 0.0
        %v633 = vadd.f32 %v631, %v632
        %v634 = vsel %vm608, %v589, 0.0
        %v635 = vadd.f32 %v633, %v634
        %v636 = vsel %vm608, %v590, 0.0
        %v637 = vadd.f32 %v635, %v636
        %v638 = vsel %vm608, %v591, 0.0
        %v639 = vadd.f32 %v637, %v638
        %v640 = vsel %vm608, %v592, 0.0
        %v641 = vadd.f32 %v639, %v640
        %v642 = vsel %vm608, %v593, 0.0
        %v643 = vadd.f32 %v641, %v642
        %v644 = vsel %vm608, %v594, 0.0
        %v645 = vadd.f32 %v643, %v644
        %v646 = vsel %vm608, %v595, 0.0
        %v647 = vadd.f32 %v645, %v646
        %v648 = vsel %vm608, %v596, 0.0
        %v649 = vadd.f32 %v647, %v648
        %v650 = vsel %vm608, %v597, 0.0
        %v651 = vadd.f32 %v649, %v650
        %v652 = vsel %vm608, %v598, 0.0
        %v653 = vadd.f32 %v651, %v652
        %v654 = vsel %vm608, %v599, 0.0
        %v655 = vadd.f32 %v653, %v654
        %v656 = vsel %vm608, %v600, 0.0
        %v657 = vadd.f32 %v655, %v656
        %v658 = vsel %vm608, %v601, 0.0
        %v659 = vadd.f32 %v657, %v658
        %v660 = vsel %vm608, %v602, 0.0
        %v661 = vadd.f32 %v659, %v660
        %v662 = vsel %vm608, %v603, 0.0
        %v663 = vadd.f32 %v661, %v662
        %v664 = vsel %vm608, %v604, 0.0
        %v665 = vadd.f32 %v663, %v664
        %v666 = vsel %vm608, %v605, 0.0
        %v667 = vadd.f32 %v665, %v666
        %v668 = vsel %vm608, %v606, 0.0
        %v669 = vadd.f32 %v667, %v668
        %v670 = vsel %vm608, %v607, 0.0
        %v671 = vadd.f32 %v669, %v670
        %v672 = vrot.slane %v671, 4
        %v673 = vadd.f32 %v671, %v672
        %v674 = vrot.slane %v673, 2
        %v675 = vadd.f32 %v673, %v674
        %v676 = vrot.slane %v675, 1
        %v677 = vadd.f32 %v675, %v676
        %v678 = vrcp.pop 256.0
        %v679 = vmul.f32 %v677, %v678
        %v680 = vpack.c.bf16 %v679, %v679
        %v681 = vld [vmem:[%s3] sm:$0xf]
        %v682 = vld [vmem:[%s3 + $0x4] sm:$0xf]
        %v683 = vld [vmem:[%s3 + $0x8] sm:$0xf]
        %v684 = vld [vmem:[%s3 + $0xc] sm:$0xf]
        %v685 = vld [vmem:[%s4] sm:$0x1]
        %v690 = vunpack.c.l.b16 %v681
        %v691 = vunpack.c.l.b16 %v682
        %v692 = vunpack.c.l.b16 %v683
        %v693 = vunpack.c.l.b16 %v684
        %v694 = vpack.c.b16 %v691, %v690
        %v695 = vpack.c.b16 %v693, %v692
        %v699 = vsel %vm608, %v680, 0
        %701 = vmatprep.subr.bf16.mxu0 0
        %702 = vmatpush1.bf16.msra.mxu0 0
        %703 = vmatprep.subr.bf16.mxu0 0
        %704 = vmatpush1.bf16.msra.mxu0 0
        %705 = vmatprep.subr.bf16.mxu0 0
        %706 = vmatpush1.bf16.msra.mxu0 0
        %707 = vmatprep.subr.bf16.mxu0 0
        %708 = vmatpush1.bf16.msra.mxu0 0
        %709 = vmatprep.subr.bf16.mxu0 0
        %710 = vmatpush1.bf16.msra.mxu0 0
        %711 = vmatprep.subr.bf16.mxu0 0
        %712 = vmatpush1.bf16.msra.mxu0 0
        %713 = vmatprep.subr.bf16.mxu0 0
        %714 = vmatpush1.bf16.msra.mxu0 %v695
        %715 = vmatprep.subr.bf16.mxu0 0
        %716 = vmatpush1.bf16.msra.mxu0 %v694
        %717 = vmatprep.subr.bf16.mxu0 0
        %718 = vmatpush2.bf16.msra.mxu0 0
        %719 = vmatprep.subr.bf16.mxu0 0
        %720 = vmatpush2.bf16.msra.mxu0 0
        %721 = vmatprep.subr.bf16.mxu0 0
        %722 = vmatpush2.bf16.msra.mxu0 0
        %723 = vmatprep.subr.bf16.mxu0 0
        %724 = vmatpush2.bf16.msra.mxu0 0
        %725 = vmatprep.subr.bf16.mxu0 0
        %726 = vmatpush2.bf16.msra.mxu0 0
        %727 = vmatprep.subr.bf16.mxu0 0
        %728 = vmatpush2.bf16.msra.mxu0 0
        %729 = vmatprep.subr.bf16.mxu0 0
        %730 = vmatpush2.bf16.msra.mxu0 0
        %731 = vmatprep.subr.bf16.mxu0 0
        %732 = vmatpush2.bf16.msra.mxu0 0
        %733 = vmatprep.mubr.bf16.mxu0 0
        %734 = vmatmul.mubr.bf16.gmra.mxu0 %v699
        %v735 = vpop.f32.mrf.mxu0
        %v736 = vadd.f32 %v685, %v735
        %v737 = vpop.f32.mrf.mxu0
        %v738 = vpop.f32.mrf.mxu0
        %v739 = vpop.f32.mrf.mxu0
        %740 = vdwg.mxu0
        %vm741 = vcmask 253952
        %742 = vst.msk [vmem:[%s216] sm:$0x1] %vm741, %v736
        %s743 = sand.u32 %s137, 1
        %s744 = scalar_lea.sflag [#allocation3], %s743
        %s745 = sand.u32 %s137, 1
        %s746 = scalar_lea.vmem [#allocation2], %s745
        // Predicated region
        $region41: #{tpu_custom_call.1} parent=39 // pred_check
          %p747 = pneg %p147
        $region42: #{tpu_custom_call.1} parent=39 // pred_check_branch
          %749 = sbr.rel (%p747) target = $region44
        $region43: #{tpu_custom_call.1} parent=39 // pred_region
          %s751 = ssub.s32 16, 16
          %752 = vsyncadd %s744, %s751
          %s753 = smul.addr %s19, 16
          %s754 = scalar_lea.hbm %s5, %s753
          %s756 = sshll.u32 %s746, 4
          %s757 = int_to_ptr.vmem [resolvable:$true] %s756
          %759 = dma.vmem_to_hbm [thread:$0]  %s757, 16, %s754, %s744
        $region44: #{tpu_custom_call.1} parent=39 // pred_fallthru
          _
      $region40: #{tpu_custom_call.1} parent=5 // pred_fallthru
        _
      %p760 = scmp.le.s32.totalorder 2, %s14
      // Predicated region
      $region45: #{tpu_custom_call.1} parent=5 // pred_check
        %p761 = pneg %p760
      $region46: #{tpu_custom_call.1} parent=5 // pred_check_branch
        %763 = sbr.rel (%p761) target = $region48
      $region47: #{tpu_custom_call.1} parent=5 // pred_region
        %s764 = ssub.s32 %s14, 2
        // Predicated region
        $region49: #{tpu_custom_call.1} parent=47 // pred_check
          %p765 = pneg %p153
        $region50: #{tpu_custom_call.1} parent=47 // pred_check_branch
          %767 = sbr.rel (%p765) target = $region52
        $region51: #{tpu_custom_call.1} parent=47 // pred_region
          %s768 = sand.u32 %s138, 1
          %s769 = scalar_lea.sflag [#allocation3], %s768
          %s770 = sand.u32 %s138, 1
          %s771 = scalar_lea.vmem [#allocation2], %s770
          %772 = dma.done %s769, 16
        $region52: #{tpu_custom_call.1} parent=47 // pred_fallthru
          _
      $region48: #{tpu_custom_call.1} parent=5 // pred_fallthru
        _
    $region6: #{tpu_custom_call.1} parent=1 // loop_footer
      %s18 = sadd.s32 1, %s14
    $region7: #{tpu_custom_call.1} parent=1 // loop_footer_branch
      %13 = sbr.rel target = $region3
    $region8: #{tpu_custom_call.1} parent=1 // loop_exit
      _
    %773 = vsyncpa [#allocation3], 1
    %s774 = scalar_lea.sflag [#allocation3], 1
    %775 = vsyncpa %s774, 1

</llo_original>
